<compile_context>
chip_gen: v6e
topology: v6e:2x2x1
jax: 0.10.0
libtpu: 0.0.40
codegen_flags: <defaults>
</compile_context>

<pallas_src>
import math

import jax
import jax.numpy as jnp
from jax.experimental import pallas as pl
from jax.experimental.pallas import tpu as pltpu


def _token_modlinear_kernel(x_ref, w_ref, smod_ref, wsq_ref, b_ref, o_ref):
    # x_ref   : (TB, N*C)  lane-dense input slab (tokens packed along lanes)
    # w_ref   : (N*C, N*O) block-diagonal weight (per-token (C,O) blocks on the diagonal)
    # smod_ref: (TB, N)    precomputed style modulation  s @ Ws^T/sqrt(S) + bs
    # wsq_ref : (1, N*O)   precomputed sum_c W[n,o,c]^2, flattened token-major
    # b_ref   : (1, N*O)   output bias, flattened token-major
    # o_ref   : (TB, N*O)  lane-dense output slab
    tb = x_ref.shape[0]
    n_tok = smod_ref.shape[1]
    no = o_ref.shape[1]
    o_per_tok = no // n_tok

    # Single MXU matmul: K = N*C fills the systolic array (one 256-wide pass on
    # v6e/v7x, a clean 2x2 of 128-tiles on v5e).  Result is already lane-dense.
    y = jnp.dot(x_ref[...], w_ref[...], preferred_element_type=jnp.float32)   # (TB, N*O)

    # Epilogue (VALU/EUP/XLU - all free under the mem-bound profile):
    #   (x*s) @ W^T * decoef == (x @ W^T) * (s * decoef)
    smod = smod_ref[...]                                                       # (TB, N)
    smod_rep = jnp.broadcast_to(
        smod[:, :, None], (tb, n_tok, o_per_tok)).reshape(tb, no)              # (TB, N*O)
    wsq = wsq_ref[...]                                                         # (1, N*O)
    scale = smod_rep * jax.lax.rsqrt(smod_rep * smod_rep * wsq + 1e-8)         # (TB, N*O)
    o_ref[...] = (y * scale + b_ref[...]).astype(o_ref.dtype)
    # TODO(synk): activation=None in this instantiation; apply an elementwise op here if configured.


def _choose_tb(batch, block_b):
    """Pick a B-tile that satisfies the (8,128) sublane rule and, for large
    batches, yields >=2 grid steps so both v7x TensorCores get work."""
    tb = min(block_b, batch)
    if tb < batch:
        tb = max(8, (tb // 8) * 8)      # sublane-aligned tile; last block may be ragged
        if tb >= batch:
            tb = batch                  # degenerate: fall back to full-batch block
    elif batch >= 16:
        tb = ((pl.cdiv(batch, 2) + 7) // 8) * 8   # split into >=2 steps (megacore)
        if tb >= batch:
            tb = batch
    return tb


def token_wise_modulated_linear(x, s, weight, bias, ws_scaled, bs, *, block_b=1024):
    """x: (B, N, C), s: (B, S), weight: (N, O, C), bias: (N, O),
    ws_scaled: (N, S) (already multiplied by 1/sqrt(S)), bs: (N,)."""
    B, N, C = x.shape
    O = weight.shape[1]

    # --- Wrapper-side precompute: all tiny relative to x / output HBM traffic ---
    s_mod = (s @ ws_scaled.T + bs[None, :]).astype(jnp.float32)               # (B, N)
    w_t = jnp.transpose(weight, (0, 2, 1)).astype(jnp.float32)                # (N, C, O)
    eye = jnp.eye(N, dtype=jnp.float32)
    # Block-diagonal weight: w_bd[n*C + c, m*O + o] = weight[n, o, c] if n == m else 0.
    w_bd = (w_t[:, :, None, :] * eye[:, None, :, None]).reshape(N * C, N * O)  # (N*C, N*O)
    wsq = jnp.sum(weight.astype(jnp.float32) ** 2, axis=-1).reshape(1, N * O)  # (1, N*O)
    bias_flat = bias.astype(jnp.float32).reshape(1, N * O)                     # (1, N*O)

    x_flat = x.reshape(B, N * C)           # lane-dense input slab (free, contiguous)

    tb = _choose_tb(B, block_b)
    grid = (pl.cdiv(B, tb),)

    out_flat = pl.pallas_call(
        _token_modlinear_kernel,
        out_shape=jax.ShapeDtypeStruct((B, N * O), x.dtype),
        grid_spec=pltpu.PrefetchScalarGridSpec(
            num_scalar_prefetch=0,
            grid=grid,
            in_specs=[
                pl.BlockSpec((tb, N * C), lambda i: (i, 0)),      # x, lane-dense B-tile
                pl.BlockSpec((N * C, N * O), lambda i: (0, 0)),   # block-diag weight (resident)
                pl.BlockSpec((tb, N), lambda i: (i, 0)),          # precomputed s_mod
                pl.BlockSpec((1, N * O), lambda i: (0, 0)),       # precomputed sum_c W^2
                pl.BlockSpec((1, N * O), lambda i: (0, 0)),       # bias
            ],
            out_specs=pl.BlockSpec((tb, N * O), lambda i: (i, 0)),
        ),
        compiler_params=pltpu.CompilerParams(
            # B-tile axis is embarrassingly parallel -> shards across v7x's 2 TCs.
            dimension_semantics=("parallel",),
            # Lane-dense blocks: at block_b=1024 this is ~5-6 MiB double-buffered,
            # comfortably under the scoped-VMEM defaults on v5e/v6e/v7x.
            vmem_limit_bytes=16 * 1024 * 1024,
        ),
    )(x_flat, w_bd, s_mod, wsq, bias_flat)

    return out_flat.reshape(B, N, O)       # free, contiguous reshape back to (B, N, O)


def reference(x, s, weight, bias, ws_scaled, bs):
    """Pure-JAX port of the PyTorch forward for validation."""
    s_mod = s @ ws_scaled.T + bs                              # (B, N)
    w = weight[None] * s_mod[:, :, None, None]                # (B, N, O, C)
    decoefs = jax.lax.rsqrt(jnp.sum(w * w, axis=3) + 1e-8)    # (B, N, O)
    xm = x * s_mod[:, :, None]                                # (B, N, C)
    y = jnp.einsum('noc,bnc->bno', weight, xm)                # (B, N, O)
    return y * decoefs + bias[None]


def _make_inputs(key, batch, table_num, in_ch, out_ch, s_dim, *, zero_bias=True):
    k_w, k_ws, k_x, k_s, k_b = jax.random.split(key, 5)
    # weight: xavier_normal_ over (table_num, out_ch, in_ch)
    fan_in = out_ch * in_ch
    fan_out = table_num * in_ch
    std = math.sqrt(2.0 / (fan_in + fan_out))
    weight = std * jax.random.normal(k_w, (table_num, out_ch, in_ch), jnp.float32)
    if zero_bias:
        bias = jnp.zeros((table_num, out_ch), jnp.float32)      # module init: zeros
    else:
        bias = 0.1 * jax.random.normal(k_b, (table_num, out_ch), jnp.float32)
    # s_mapping = FullyConnectedLayer(s_dim, table_num, bias_init=1)
    ws = jax.random.normal(k_ws, (table_num, s_dim), jnp.float32)
    ws_scaled = ws / math.sqrt(s_dim)
    bs = jnp.ones((table_num,), jnp.float32)
    x = jax.random.normal(k_x, (batch, table_num, in_ch), jnp.float32)
    s = jax.random.normal(k_s, (batch, s_dim), jnp.float32)
    return x, s, weight, bias, ws_scaled, bs


if __name__ == "__main__":
    table_num, in_ch, out_ch, s_dim = 8, 32, 32, 16
    key = jax.random.PRNGKey(0)
    k1, k2 = jax.random.split(key)

    # Test 1: module-sized demo (batch=2), single grid step, full-batch block.
    x, s, weight, bias, ws_scaled, bs = _make_inputs(k1, 2, table_num, in_ch, out_ch, s_dim)
    out = token_wise_modulated_linear(x, s, weight, bias, ws_scaled, bs)
    out = jax.block_until_ready(out)
    ref = reference(x, s, weight, bias, ws_scaled, bs)
    assert out.shape == (2, table_num, out_ch), out.shape
    assert jnp.allclose(out, ref, atol=1e-5, rtol=1e-5), float(jnp.max(jnp.abs(out - ref)))

    # Test 2: multi-step grid with a ragged last B-tile (B=20, tb=8 -> 3 steps),
    # non-zero bias, to confirm partial-block masking and the bias path.
    x2, s2, w2, b2, ws2, bs2 = _make_inputs(
        k2, 20, table_num, in_ch, out_ch, s_dim, zero_bias=False)
    out2 = token_wise_modulated_linear(x2, s2, w2, b2, ws2, bs2, block_b=8)
    out2 = jax.block_until_ready(out2)
    ref2 = reference(x2, s2, w2, b2, ws2, bs2)
    assert out2.shape == (20, table_num, out_ch), out2.shape
    assert jnp.allclose(out2, ref2, atol=1e-5, rtol=1e-5), float(jnp.max(jnp.abs(out2 - ref2)))

    print("KERNEL_OK")
</pallas_src>

<mosaic_0001>
module attributes {stable_mosaic.version = 11 : i64} {
  func.func @_token_modlinear_kernel(%arg0: i32, %arg1: memref<2x256xf32, #tpu.memory_space<vmem>>, %arg2: memref<256x256xf32, #tpu.memory_space<vmem>>, %arg3: memref<2x8xf32, #tpu.memory_space<vmem>>, %arg4: memref<1x256xf32, #tpu.memory_space<vmem>>, %arg5: memref<1x256xf32, #tpu.memory_space<vmem>>, %arg6: memref<2x256xf32, #tpu.memory_space<vmem>>) attributes {dimension_semantics = [#tpu.dimension_semantics<parallel>], iteration_bounds = array<i64: 1>, scalar_prefetch = 0 : i64, scratch_operands = 0 : i64, tpu.core_type = #tpu.core_type<tc>, window_params = [{transform_indices = @transform_0, window_bounds = array<i64: 2, 256>}, {pipeline_mode = #tpu.pipeline_mode<synchronous>, transform_indices = @transform_1, window_bounds = array<i64: 256, 256>}, {transform_indices = @transform_2, window_bounds = array<i64: 2, 8>}, {pipeline_mode = #tpu.pipeline_mode<synchronous>, transform_indices = @transform_3, window_bounds = array<i64: 1, 256>}, {pipeline_mode = #tpu.pipeline_mode<synchronous>, transform_indices = @transform_4, window_bounds = array<i64: 1, 256>}, {transform_indices = @transform_5, window_bounds = array<i64: 2, 256>}]} {
    %c0 = arith.constant 0 : index
    %c0_0 = arith.constant 0 : index
    %0 = vector.load %arg1[%c0, %c0_0] : memref<2x256xf32, #tpu.memory_space<vmem>>, vector<2x256xf32>
    %c0_1 = arith.constant 0 : index
    %c0_2 = arith.constant 0 : index
    %1 = vector.load %arg2[%c0_1, %c0_2] : memref<256x256xf32, #tpu.memory_space<vmem>>, vector<256x256xf32>
    %cst = arith.constant dense<0.000000e+00> : vector<2x256xf32>
    %2 = tpu.matmul %0, %1, %cst {dimension_numbers = #tpu.dot_dimension_numbers<[1], [0], [0], [1], [0, 0, 1, 1], [], []>} : vector<2x256xf32>, vector<256x256xf32>, vector<2x256xf32> -> vector<2x256xf32>
    %c0_3 = arith.constant 0 : index
    %c0_4 = arith.constant 0 : index
    %3 = vector.load %arg3[%c0_3, %c0_4] : memref<2x8xf32, #tpu.memory_space<vmem>>, vector<2x8xf32>
    %4 = vector.shape_cast %3 : vector<2x8xf32> to vector<2x8x1xf32>
    %5 = vector.shape_cast %4 : vector<2x8x1xf32> to vector<2x8x1xf32>
    %6 = vector.broadcast %5 : vector<2x8x1xf32> to vector<2x8x32xf32>
    %7 = vector.shape_cast %6 : vector<2x8x32xf32> to vector<2x256xf32>
    %c0_5 = arith.constant 0 : index
    %c0_6 = arith.constant 0 : index
    %8 = vector.load %arg4[%c0_5, %c0_6] : memref<1x256xf32, #tpu.memory_space<vmem>>, vector<1x256xf32>
    %9 = arith.mulf %7, %7 : vector<2x256xf32>
    %10 = vector.broadcast %8 : vector<1x256xf32> to vector<2x256xf32>
    %11 = arith.mulf %9, %10 : vector<2x256xf32>
    %cst_7 = arith.constant 9.99999993E-9 : f32
    %12 = vector.broadcast %cst_7 : f32 to vector<2x256xf32>
    %13 = arith.addf %11, %12 : vector<2x256xf32>
    %14 = math.rsqrt %13 : vector<2x256xf32>
    %15 = arith.mulf %7, %14 : vector<2x256xf32>
    %16 = arith.mulf %2, %15 : vector<2x256xf32>
    %c0_8 = arith.constant 0 : index
    %c0_9 = arith.constant 0 : index
    %17 = vector.load %arg5[%c0_8, %c0_9] : memref<1x256xf32, #tpu.memory_space<vmem>>, vector<1x256xf32>
    %18 = vector.broadcast %17 : vector<1x256xf32> to vector<2x256xf32>
    %19 = arith.addf %16, %18 : vector<2x256xf32>
    %c0_10 = arith.constant 0 : index
    %c0_11 = arith.constant 0 : index
    %20 = vector.load %arg6[%c0_10, %c0_11] : memref<2x256xf32, #tpu.memory_space<vmem>>, vector<2x256xf32>
    tpu.vector_store %arg6[%c0_10, %c0_11], %19 {strides = array<i32>} : memref<2x256xf32, #tpu.memory_space<vmem>>, vector<2x256xf32>,
    return
  }
  func.func @transform_0(%arg0: i32) -> (i32, i32) {
    %c0_i32 = arith.constant 0 : i32
    %c0_i32_0 = arith.constant 0 : i32
    return %arg0, %c0_i32 : i32, i32
  }
  func.func @transform_1(%arg0: i32) -> (i32, i32) {
    %c0_i32 = arith.constant 0 : i32
    %c0_i32_0 = arith.constant 0 : i32
    %c0_i32_1 = arith.constant 0 : i32
    return %c0_i32, %c0_i32_0 : i32, i32
  }
  func.func @transform_2(%arg0: i32) -> (i32, i32) {
    %c0_i32 = arith.constant 0 : i32
    %c0_i32_0 = arith.constant 0 : i32
    return %arg0, %c0_i32 : i32, i32
  }
  func.func @transform_3(%arg0: i32) -> (i32, i32) {
    %c0_i32 = arith.constant 0 : i32
    %c0_i32_0 = arith.constant 0 : i32
    %c0_i32_1 = arith.constant 0 : i32
    return %c0_i32, %c0_i32_0 : i32, i32
  }
  func.func @transform_4(%arg0: i32) -> (i32, i32) {
    %c0_i32 = arith.constant 0 : i32
    %c0_i32_0 = arith.constant 0 : i32
    %c0_i32_1 = arith.constant 0 : i32
    return %c0_i32, %c0_i32_0 : i32, i32
  }
  func.func @transform_5(%arg0: i32) -> (i32, i32) {
    %c0_i32 = arith.constant 0 : i32
    %c0_i32_0 = arith.constant 0 : i32
    return %arg0, %c0_i32 : i32, i32
  }
}

</mosaic_0001>

<llo_original>
// kernel: tpu_custom_call.1
$region0: #{tpu_custom_call.1}
  #allocation0 [shape = 'u32[]', space=smem, size = 0x4, offset = 0x4, fixed_abs, tag = 'smem constant byte address 0x4 - core index']
  #allocation1 [shape = 'u32[144,128]{1,0:T(1,128)}', space=vmem, size = 0x12000, scoped, tag = 'internal scratch']
  %s0 = inlined_call_operand.hbm [shape: f32[2,256], index: 0, kind: input, shape index: {}]
  %s1 = inlined_call_operand.hbm [shape: f32[256,256], index: 1, kind: input, shape index: {}]
  %s2 = inlined_call_operand.vmem [shape: f32[2,8], index: 2, kind: input, shape index: {}]
  %s3 = inlined_call_operand.vmem [shape: f32[1,256], index: 3, kind: input, shape index: {}]
  %s4 = inlined_call_operand.vmem [shape: f32[1,256], index: 4, kind: input, shape index: {}]
  %s5 = inlined_call_operand.hbm [shape: f32[2,256], index: 5, kind: output, shape index: {}]
  %s6 = sld [smem:[#allocation0]]
  $region38: #{tpu_custom_call.1} parent=0
    _
  %s8 = ssub.s32 1, %s6
  %s9 = scalar_select 0, %s8, %s6
  $region1: #{tpu_custom_call.1} parent=0
    #allocation2 [shape = 'u8[2048]{0}', space=vmem, size = 0x800, scoped, tag = 'input window, operand 0, single buffered']
    #allocation3 [shape = 's32[1]{0}', space=sflag, size = 0x4, scoped, tag = 'scoped memory for tpu_custom_call.1']
    #allocation4 [shape = 's32[1]{0}', space=sflag, size = 0x4, scoped, tag = 'scoped memory for tpu_custom_call.1']
    #allocation5 [shape = 'u8[262144]{0}', space=vmem, size = 0x40000, scoped, tag = 'input window, operand 1, single buffered']
    #allocation6 [shape = 's32[1]{0}', space=sflag, size = 0x4, scoped, tag = 'scoped memory for tpu_custom_call.1']
    #allocation7 [shape = 'u8[2048]{0}', space=vmem, size = 0x800, scoped, tag = 'output window, operand 0, single buffered']
    %10 = vsyncpa [#allocation3], 0
    %11 = vsyncpa [#allocation6], 0
    %12 = vsyncpa [#allocation4], 0
    // Predicated region
    $region2: #{tpu_custom_call.1} parent=1 // pred_check
      _
    $region3: #{tpu_custom_call.1} parent=1 // pred_check_branch
      %14 = sbr.rel (0) target = $region5
    $region4: #{tpu_custom_call.1} parent=1 // pred_region
      %s16 = ssub.s32 64, 64
      %17 = vsyncadd [#allocation3], %s16
      %s19 = sshll.u32 [#allocation2], 4
      %s20 = int_to_ptr.vmem [resolvable:$true] %s19
      %22 = dma.hbm_to_vmem [thread:$0]  %s0, 64, %s20, [#allocation3]
    $region5: #{tpu_custom_call.1} parent=1 // pred_fallthru
      _
    // Predicated region
    $region6: #{tpu_custom_call.1} parent=1 // pred_check
      _
    $region7: #{tpu_custom_call.1} parent=1 // pred_check_branch
      %24 = sbr.rel (0) target = $region9
    $region8: #{tpu_custom_call.1} parent=1 // pred_region
      %s26 = ssub.s32 8192, 8192
      %27 = vsyncadd [#allocation6], %s26
      %s28 = sshll.u32 [#allocation5], 4
      %s29 = int_to_ptr.vmem [resolvable:$true] %s28
      %34 = dma.hbm_to_vmem [thread:$0]  %s1, 8192, %s29, [#allocation6], 256, 256, 16
    $region9: #{tpu_custom_call.1} parent=1 // pred_fallthru
      _
    // Predicated region
    $region10: #{tpu_custom_call.1} parent=1 // pred_check
      _
    $region11: #{tpu_custom_call.1} parent=1 // pred_check_branch
      %36 = sbr.rel (0) target = $region13
    $region12: #{tpu_custom_call.1} parent=1 // pred_region
      _
    $region13: #{tpu_custom_call.1} parent=1 // pred_fallthru
      _
    // Predicated region
    $region14: #{tpu_custom_call.1} parent=1 // pred_check
      _
    $region15: #{tpu_custom_call.1} parent=1 // pred_check_branch
      %38 = sbr.rel (0) target = $region17
    $region16: #{tpu_custom_call.1} parent=1 // pred_region
      _
    $region17: #{tpu_custom_call.1} parent=1 // pred_fallthru
      _
    // Predicated region
    $region18: #{tpu_custom_call.1} parent=1 // pred_check
      _
    $region19: #{tpu_custom_call.1} parent=1 // pred_check_branch
      %40 = sbr.rel (0) target = $region21
    $region20: #{tpu_custom_call.1} parent=1 // pred_region
      _
    $region21: #{tpu_custom_call.1} parent=1 // pred_fallthru
      _
    // Predicated region
    $region22: #{tpu_custom_call.1} parent=1 // pred_check
      _
    $region23: #{tpu_custom_call.1} parent=1 // pred_check_branch
      %42 = sbr.rel (0) target = $region25
    $region24: #{tpu_custom_call.1} parent=1 // pred_region
      %43 = dma.done [#allocation3], 64
    $region25: #{tpu_custom_call.1} parent=1 // pred_fallthru
      _
    // Predicated region
    $region26: #{tpu_custom_call.1} parent=1 // pred_check
      _
    $region27: #{tpu_custom_call.1} parent=1 // pred_check_branch
      %45 = sbr.rel (0) target = $region29
    $region28: #{tpu_custom_call.1} parent=1 // pred_region
      %46 = dma.done [#allocation6], 8192
    $region29: #{tpu_custom_call.1} parent=1 // pred_fallthru
      _
    %v47 = vld [vmem:[#allocation2] sm:$0xf]
    %v48 = vld [vmem:[#allocation5] sm:$0xff]
    %v49 = vld [vmem:[#allocation5 + $0x8] sm:$0xff]
    %v50 = vld [vmem:[#allocation5 + $0x10] sm:$0xff]
    %v51 = vld [vmem:[#allocation5 + $0x18] sm:$0xff]
    %v52 = vld [vmem:[#allocation5 + $0x20] sm:$0xff]
    %v53 = vld [vmem:[#allocation5 + $0x28] sm:$0xff]
    %v54 = vld [vmem:[#allocation5 + $0x30] sm:$0xff]
    %v55 = vld [vmem:[#allocation5 + $0x38] sm:$0xff]
    %v56 = vld [vmem:[#allocation5 + $0x40] sm:$0xff]
    %v57 = vld [vmem:[#allocation5 + $0x48] sm:$0xff]
    %v58 = vld [vmem:[#allocation5 + $0x50] sm:$0xff]
    %v59 = vld [vmem:[#allocation5 + $0x58] sm:$0xff]
    %v60 = vld [vmem:[#allocation5 + $0x60] sm:$0xff]
    %v61 = vld [vmem:[#allocation5 + $0x68] sm:$0xff]
    %v62 = vld [vmem:[#allocation5 + $0x70] sm:$0xff]
    %v63 = vld [vmem:[#allocation5 + $0x78] sm:$0xff]
    %v64 = vld [vmem:[#allocation5 + $0x80] sm:$0xff]
    %v65 = vld [vmem:[#allocation5 + $0x88] sm:$0xff]
    %v66 = vld [vmem:[#allocation5 + $0x90] sm:$0xff]
    %v67 = vld [vmem:[#allocation5 + $0x98] sm:$0xff]
    %v68 = vld [vmem:[#allocation5 + $0xa0] sm:$0xff]
    %v69 = vld [vmem:[#allocation5 + $0xa8] sm:$0xff]
    %v70 = vld [vmem:[#allocation5 + $0xb0] sm:$0xff]
    %v71 = vld [vmem:[#allocation5 + $0xb8] sm:$0xff]
    %v72 = vld [vmem:[#allocation5 + $0xc0] sm:$0xff]
    %v73 = vld [vmem:[#allocation5 + $0xc8] sm:$0xff]
    %v74 = vld [vmem:[#allocation5 + $0xd0] sm:$0xff]
    %v75 = vld [vmem:[#allocation5 + $0xd8] sm:$0xff]
    %v76 = vld [vmem:[#allocation5 + $0xe0] sm:$0xff]
    %v77 = vld [vmem:[#allocation5 + $0xe8] sm:$0xff]
    %v78 = vld [vmem:[#allocation5 + $0xf0] sm:$0xff]
    %v79 = vld [vmem:[#allocation5 + $0xf8] sm:$0xff]
    %v80 = vld [vmem:[#allocation5 + $0x100] sm:$0xff]
    %v81 = vld [vmem:[#allocation5 + $0x108] sm:$0xff]
    %v82 = vld [vmem:[#allocation5 + $0x110] sm:$0xff]
    %v83 = vld [vmem:[#allocation5 + $0x118] sm:$0xff]
    %v84 = vld [vmem:[#allocation5 + $0x120] sm:$0xff]
    %v85 = vld [vmem:[#allocation5 + $0x128] sm:$0xff]
    %v86 = vld [vmem:[#allocation5 + $0x130] sm:$0xff]
    %v87 = vld [vmem:[#allocation5 + $0x138] sm:$0xff]
    %v88 = vld [vmem:[#allocation5 + $0x140] sm:$0xff]
    %v89 = vld [vmem:[#allocation5 + $0x148] sm:$0xff]
    %v90 = vld [vmem:[#allocation5 + $0x150] sm:$0xff]
    %v91 = vld [vmem:[#allocation5 + $0x158] sm:$0xff]
    %v92 = vld [vmem:[#allocation5 + $0x160] sm:$0xff]
    %v93 = vld [vmem:[#allocation5 + $0x168] sm:$0xff]
    %v94 = vld [vmem:[#allocation5 + $0x170] sm:$0xff]
    %v95 = vld [vmem:[#allocation5 + $0x178] sm:$0xff]
    %v96 = vld [vmem:[#allocation5 + $0x180] sm:$0xff]
    %v97 = vld [vmem:[#allocation5 + $0x188] sm:$0xff]
    %v98 = vld [vmem:[#allocation5 + $0x190] sm:$0xff]
    %v99 = vld [vmem:[#allocation5 + $0x198] sm:$0xff]
    %v100 = vld [vmem:[#allocation5 + $0x1a0] sm:$0xff]
    %v101 = vld [vmem:[#allocation5 + $0x1a8] sm:$0xff]
    %v102 = vld [vmem:[#allocation5 + $0x1b0] sm:$0xff]
    %v103 = vld [vmem:[#allocation5 + $0x1b8] sm:$0xff]
    %v104 = vld [vmem:[#allocation5 + $0x1c0] sm:$0xff]
    %v105 = vld [vmem:[#allocation5 + $0x1c8] sm:$0xff]
    %v106 = vld [vmem:[#allocation5 + $0x1d0] sm:$0xff]
    %v107 = vld [vmem:[#allocation5 + $0x1d8] sm:$0xff]
    %v108 = vld [vmem:[#allocation5 + $0x1e0] sm:$0xff]
    %v109 = vld [vmem:[#allocation5 + $0x1e8] sm:$0xff]
    %v110 = vld [vmem:[#allocation5 + $0x1f0] sm:$0xff]
    %v111 = vld [vmem:[#allocation5 + $0x1f8] sm:$0xff]
    %v114 = vunpack.c.l.s4 1983009808
    %v115 = vunpack.c.0.s8 %v114
    %v116 = vlaneseq
    %v117 = vshrl.u32 %v116, 7
    %v118 = vsub.s32 %v115, %v117
    %v119 = vrot.slane %v47, %v118
    %v120 = vcombine.high %v119, %v119
    %123 = vmatprep.subr.mxu0 %v79
    %124 = vmatpush1.msra.mxu0 %v78
    %125 = vmatprep.subr.mxu0 %v77
    %126 = vmatpush1.msra.mxu0 %v76
    %127 = vmatprep.subr.mxu0 %v75
    %128 = vmatpush1.msra.mxu0 %v74
    %129 = vmatprep.subr.mxu0 %v73
    %130 = vmatpush1.msra.mxu0 %v72
    %131 = vmatprep.subr.mxu0 %v71
    %132 = vmatpush1.msra.mxu0 %v70
    %133 = vmatprep.subr.mxu0 %v69
    %134 = vmatpush1.msra.mxu0 %v68
    %135 = vmatprep.subr.mxu0 %v67
    %136 = vmatpush1.msra.mxu0 %v66
    %137 = vmatprep.subr.mxu0 %v65
    %138 = vmatpush1.msra.mxu0 %v64
    %139 = vmatprep.subr.mxu0 %v63
    %140 = vmatpush1.msra.mxu0 %v62
    %141 = vmatprep.subr.mxu0 %v61
    %142 = vmatpush1.msra.mxu0 %v60
    %143 = vmatprep.subr.mxu0 %v59
    %144 = vmatpush1.msra.mxu0 %v58
    %145 = vmatprep.subr.mxu0 %v57
    %146 = vmatpush1.msra.mxu0 %v56
    %147 = vmatprep.subr.mxu0 %v55
    %148 = vmatpush1.msra.mxu0 %v54
    %149 = vmatprep.subr.mxu0 %v53
    %150 = vmatpush1.msra.mxu0 %v52
    %151 = vmatprep.subr.mxu0 %v51
    %152 = vmatpush1.msra.mxu0 %v50
    %153 = vmatprep.subr.mxu0 %v49
    %154 = vmatpush1.msra.mxu0 %v48
    %155 = vmatprep.subr.mxu0 %v111
    %156 = vmatpush2.msra.mxu0 %v110
    %157 = vmatprep.subr.mxu0 %v109
    %158 = vmatpush2.msra.mxu0 %v108
    %159 = vmatprep.subr.mxu0 %v107
    %160 = vmatpush2.msra.mxu0 %v106
    %161 = vmatprep.subr.mxu0 %v105
    %162 = vmatpush2.msra.mxu0 %v104
    %163 = vmatprep.subr.mxu0 %v103
    %164 = vmatpush2.msra.mxu0 %v102
    %165 = vmatprep.subr.mxu0 %v101
    %166 = vmatpush2.msra.mxu0 %v100
    %167 = vmatprep.subr.mxu0 %v99
    %168 = vmatpush2.msra.mxu0 %v98
    %169 = vmatprep.subr.mxu0 %v97
    %170 = vmatpush2.msra.mxu0 %v96
    %171 = vmatprep.subr.mxu0 %v95
    %172 = vmatpush2.msra.mxu0 %v94
    %173 = vmatprep.subr.mxu0 %v93
    %174 = vmatpush2.msra.mxu0 %v92
    %175 = vmatprep.subr.mxu0 %v91
    %176 = vmatpush2.msra.mxu0 %v90
    %177 = vmatprep.subr.mxu0 %v89
    %178 = vmatpush2.msra.mxu0 %v88
    %179 = vmatprep.subr.mxu0 %v87
    %180 = vmatpush2.msra.mxu0 %v86
    %181 = vmatprep.subr.mxu0 %v85
    %182 = vmatpush2.msra.mxu0 %v84
    %183 = vmatprep.subr.mxu0 %v83
    %184 = vmatpush2.msra.mxu0 %v82
    %185 = vmatprep.subr.mxu0 %v81
    %186 = vmatpush2.msra.mxu0 %v80
    %187 = vmatprep.mubr.f32.mxu0 %v120
    %188 = vmatmul.mubr.f32.gmra.mxu0 %v119
    %v189 = vpop.f32.mrf.mxu0
    %v190 = vadd.f32 0.0, %v189
    %v191 = vpop.f32.mrf.mxu0
    %v192 = vadd.f32 0.0, %v191
    %193 = vdwg.mxu0
    %v194 = vld [vmem:[%s2] sm:$0x3]
    %v195 = vlaneseq
    %v196 = vshrl.u32 %v195, 7
    %v197 = vsub.s32 0, %v196
    %v198 = vrot.slane %v194, %v197
    %200 = vbcast.lane.b32.xlu0 %v198, 256
    %v201 = vpop.permute.xlu0 %200
    %v202 = vlaneseq
    %v203 = vshrl.u32 %v202, 7
    %v204 = vsub.s32 1, %v203
    %v205 = vrot.slane %v194, %v204
    %207 = vbcast.lane.b32.xlu0 %v205, 256
    %v208 = vpop.permute.xlu0 %207
    %v209 = vcombine.high %v201, 0.0
    %v211 = vunpack.c.l.s4 1983009808
    %v212 = vunpack.c.0.s8 %v211
    %v213 = vlaneseq
    %v214 = vshrl.u32 %v213, 7
    %v215 = vsub.s32 %v212, %v214
    %v216 = vrot.slane %v201, %v215
    %v218 = vunpack.c.l.s4 1983009808
    %v219 = vunpack.c.0.s8 %v218
    %v220 = vlaneseq
    %v221 = vshrl.u32 %v220, 7
    %v222 = vsub.s32 %v219, %v221
    %v223 = vrot.slane %v209, %v222
    %v224 = vcombine.high %v208, 0.0
    %v226 = vunpack.c.l.s4 1983009808
    %v227 = vunpack.c.0.s8 %v226
    %v228 = vlaneseq
    %v229 = vshrl.u32 %v228, 7
    %v230 = vsub.s32 %v227, %v229
    %v231 = vrot.slane %v208, %v230
    %v233 = vunpack.c.l.s4 1983009808
    %v234 = vunpack.c.0.s8 %v233
    %v235 = vlaneseq
    %v236 = vshrl.u32 %v235, 7
    %v237 = vsub.s32 %v234, %v236
    %v238 = vrot.slane %v224, %v237
    %v239 = vcombine.low %v216, %v231
    %v240 = vcombine.high %v216, %v231
    %v242 = vunpack.c.l.s4 1934713408
    %v243 = vunpack.c.0.s8 %v242
    %v244 = vlaneseq
    %v245 = vshrl.u32 %v244, 7
    %v246 = vsub.s32 %v243, %v245
    %v247 = vrot.slane %v239, %v246
    %v249 = vunpack.c.l.s4 1934713408
    %v250 = vunpack.c.0.s8 %v249
    %v251 = vlaneseq
    %v252 = vshrl.u32 %v251, 7
    %v253 = vsub.s32 %v250, %v252
    %v254 = vrot.slane %v240, %v253
    %v255 = vcombine.low %v223, %v238
    %v256 = vcombine.high %v223, %v238
    %v258 = vunpack.c.l.s4 1934713408
    %v259 = vunpack.c.0.s8 %v258
    %v260 = vlaneseq
    %v261 = vshrl.u32 %v260, 7
    %v262 = vsub.s32 %v259, %v261
    %v263 = vrot.slane %v255, %v262
    %v265 = vunpack.c.l.s4 1934713408
    %v266 = vunpack.c.0.s8 %v265
    %v267 = vlaneseq
    %v268 = vshrl.u32 %v267, 7
    %v269 = vsub.s32 %v266, %v268
    %v270 = vrot.slane %v256, %v269
    %v271 = vcombine.high %v247, 0.0
    %v272 = vcombine.high %v254, 0.0
    %v273 = vcombine.high %v263, 0.0
    %v274 = vcombine.high %v270, 0.0
    %276 = vrot.lane.b32.xlu0 %v271, 32
    %v277 = vpop.permute.xlu0 %276
    %280 = vrot.lane.b32.xlu0 %v254, 64
    %v281 = vpop.permute.xlu0 %280
    %284 = vrot.lane.b32.xlu0 %v272, 96
    %v285 = vpop.permute.xlu0 %284
    %288 = vrot.lane.b32.xlu0 %v273, 32
    %v289 = vpop.permute.xlu0 %288
    %292 = vrot.lane.b32.xlu0 %v270, 64
    %v293 = vpop.permute.xlu0 %292
    %296 = vrot.lane.b32.xlu0 %v274, 96
    %v297 = vpop.permute.xlu0 %296
    %vm299 = vcmask 261120
    %v300 = vsel %vm299, %v247, %v277
    %vm301 = vcmask 523264
    %v302 = vsel %vm301, %v300, %v281
    %vm303 = vcmask 785408
    %v304 = vsel %vm303, %v302, %v285
    %v305 = vsel %vm299, %v263, %v289
    %v306 = vsel %vm301, %v305, %v293
    %v307 = vsel %vm303, %v306, %v297
    %v308 = vld [vmem:[%s3] sm:$0x3]
    %v309 = vmul.f32 %v304, %v304
    %v310 = vmul.f32 %v307, %v307
    %v312 = vlaneseq
    %v313 = vshrl.u32 %v312, 7
    %v314 = vsub.s32 0, %v313
    %v315 = vrot.slane %v308, %v314
    %v316 = vlaneseq
    %v317 = vshrl.u32 %v316, 7
    %v318 = vsub.s32 1, %v317
    %v319 = vrot.slane %v308, %v318
    %v322 = vmul.f32 %v309, %v315
    %v323 = vmul.f32 %v310, %v319
    %v324 = vadd.f32 %v322, 1e-08
    %v325 = vadd.f32 %v323, 1e-08
    %v326 = vrsqrt.pop %v324
    %v327 = vrsqrt.pop %v325
    %v328 = vmul.f32 %v304, %v326
    %v329 = vmul.f32 %v307, %v327
    %v330 = vmul.f32 %v190, %v328
    %v331 = vmul.f32 %v192, %v329
    %v332 = vld [vmem:[%s4] sm:$0x3]
    %v334 = vlaneseq
    %v335 = vshrl.u32 %v334, 7
    %v336 = vsub.s32 0, %v335
    %v337 = vrot.slane %v332, %v336
    %v338 = vlaneseq
    %v339 = vshrl.u32 %v338, 7
    %v340 = vsub.s32 1, %v339
    %v341 = vrot.slane %v332, %v340
    %v344 = vadd.f32 %v330, %v337
    %v345 = vadd.f32 %v331, %v341
    %v348 = vcombine.low %v344, %v345
    %v350 = vunpack.c.l.s4 1983009808
    %v351 = vunpack.c.0.s8 %v350
    %v352 = vlaneseq
    %v353 = vshrl.u32 %v352, 7
    %v354 = vsub.s32 %v351, %v353
    %v355 = vrot.slane %v348, %v354
    %357 = vst [vmem:[#allocation7] sm:$0xf] %v355
    // Predicated region
    $region30: #{tpu_custom_call.1} parent=1 // pred_check
      _
    $region31: #{tpu_custom_call.1} parent=1 // pred_check_branch
      %359 = sbr.rel (0) target = $region33
    $region32: #{tpu_custom_call.1} parent=1 // pred_region
      %s361 = ssub.s32 64, 64
      %362 = vsyncadd [#allocation4], %s361
      %s364 = sshll.u32 [#allocation7], 4
      %s365 = int_to_ptr.vmem [resolvable:$true] %s364
      %367 = dma.vmem_to_hbm [thread:$0]  %s365, 64, %s5, [#allocation4]
    $region33: #{tpu_custom_call.1} parent=1 // pred_fallthru
      _
    // Predicated region
    $region34: #{tpu_custom_call.1} parent=1 // pred_check
      _
    $region35: #{tpu_custom_call.1} parent=1 // pred_check_branch
      %369 = sbr.rel (0) target = $region37
    $region36: #{tpu_custom_call.1} parent=1 // pred_region
      %370 = dma.done [#allocation4], 64
    $region37: #{tpu_custom_call.1} parent=1 // pred_fallthru
      _
    %371 = vsyncpa [#allocation3], 1
    %372 = vsyncpa [#allocation6], 1
    %373 = vsyncpa [#allocation4], 1

</llo_original>
